<compile_context>
chip_gen: v7x
topology: tpu7x:2x2x1
jax: 0.10.0
libtpu: 0.0.40
codegen_flags: <defaults>
</compile_context>

<pallas_src>
import functools
import math

import jax
import jax.numpy as jnp
from jax.experimental import pallas as pl
from jax.experimental.pallas import tpu as pltpu

_NEG_BIG = -1.0e30  # baked into padded classifier-bias lanes; exp() -> 0


def _round_up(n, m):
    return ((n + m - 1) // m) * m


def _pick_batch_tiling(batch):
    """Pad batch to a multiple of 16; pick the largest 16-aligned tile that
    divides it, preferring >=2 grid steps (v7x megacore) when possible."""
    b_pad = _round_up(max(batch, 1), 16)
    limit = min(512, b_pad if b_pad < 32 else b_pad // 2)
    tile, t = 16, 16
    while t <= limit:
        if b_pad % t == 0:
            tile = t
        t += 16
    return b_pad, tile


def _vmem_limit_bytes():
    try:
        cap = pltpu.get_tpu_info().vmem_capacity_bytes
    except Exception:
        cap = 64 * 1024 * 1024
    # ~25% headroom for compiler temps; cap at 64 MiB (v5e/v6e comfort zone).
    return int(min(cap * 3 // 4, 64 * 1024 * 1024))


# ----------------------------------------------------------------------------
# Fused kernel: base projection -> bottleneck -> classifier -> softmax
# ----------------------------------------------------------------------------
def jan_fused_kernel(pooled_ref, wbase_ref, bbase_ref,
                     wbott_ref, bbott_ref, wcls_ref, bcls_ref,
                     bott_ref, out_ref, sm_ref, *, f_chunk):
    # pooled_ref : (TILE_B, Cin_pad)  bf16   pooled image features
    # wbase_ref  : (Cin_pad, F_pad)   bf16   stand-in backbone projection
    # bbase_ref  : (1, F_pad)         f32
    # wbott_ref  : (F_pad, Db_pad)    bf16   bottleneck_layer.weight^T (padded)
    # bbott_ref  : (1, Db_pad)        f32
    # wcls_ref   : (Db_pad, C_pad)    bf16   classifier_layer.weight^T (padded)
    # bcls_ref   : (1, C_pad)         f32    (padded lanes hold -1e30)
    pooled = pooled_ref[...]
    f_pad = wbase_ref.shape[1]
    n_chunks = f_pad // f_chunk

    # Chunk the hidden dim: keeps the f32 "feats" intermediate at
    # (TILE_B, f_chunk) instead of (TILE_B, F_pad). Static Python loop.
    acc = None
    for c in range(n_chunks):
        lo = c * f_chunk
        hi = lo + f_chunk
        feats_c = jnp.dot(pooled, wbase_ref[:, lo:hi],
                          preferred_element_type=jnp.float32) + bbase_ref[:, lo:hi]
        contrib = jnp.dot(feats_c.astype(jnp.bfloat16), wbott_ref[lo:hi, :],
                          preferred_element_type=jnp.float32)
        acc = contrib if acc is None else acc + contrib

    # bottleneck_layer(features)
    bott = acc + bbott_ref[...]
    bott_ref[...] = bott

    # classifier_layer(features); padded class lanes get -1e30 from the bias.
    logits = jnp.dot(bott.astype(jnp.bfloat16), wcls_ref[...],
                     preferred_element_type=jnp.float32) + bcls_ref[...]
    out_ref[...] = logits

    # nn.Softmax() over dim=1. Padded lanes underflow to exactly 0 via the
    # -1e30 bias. Exact division (not approx reciprocal) so rows sum to 1.
    m = jnp.max(logits, axis=-1, keepdims=True)
    e = jnp.exp(logits - m)
    denom = jnp.sum(e, axis=-1, keepdims=True)
    sm_ref[...] = e / denom


def jan_head_padded(pooled_pad, params, tile_b):
    """pooled_pad: (B_pad, Cin_pad) bf16 -> padded (bottleneck, logits, softmax)."""
    b_pad, cin_pad = pooled_pad.shape
    f_pad = params["w_base"].shape[1]
    db_pad = params["w_bott"].shape[1]
    c_pad = params["w_cls"].shape[1]

    grid = (b_pad // tile_b,)
    f_chunk = math.gcd(f_pad, 512)  # 128/256/512, divides f_pad

    # Grid-invariant operands: keep a single VMEM buffer (no double-buffering).
    resident = functools.partial(pl.BlockSpec, index_map=lambda i: (0, 0),
                                 pipeline_mode=pl.Buffered(1))

    kernel = functools.partial(jan_fused_kernel, f_chunk=f_chunk)
    return pl.pallas_call(
        kernel,
        grid=grid,
        in_specs=[
            pl.BlockSpec((tile_b, cin_pad), lambda i: (i, 0)),  # pooled (streamed)
            resident((cin_pad, f_pad)),
            resident((1, f_pad)),
            resident((f_pad, db_pad)),
            resident((1, db_pad)),
            resident((db_pad, c_pad)),
            resident((1, c_pad)),
        ],
        out_specs=(
            pl.BlockSpec((tile_b, db_pad), lambda i: (i, 0)),   # bottleneck feats
            pl.BlockSpec((tile_b, c_pad), lambda i: (i, 0)),    # logits
            pl.BlockSpec((tile_b, c_pad), lambda i: (i, 0)),    # softmax
        ),
        out_shape=(
            jax.ShapeDtypeStruct((b_pad, db_pad), jnp.float32),
            jax.ShapeDtypeStruct((b_pad, c_pad), jnp.float32),
            jax.ShapeDtypeStruct((b_pad, c_pad), jnp.float32),
        ),
        compiler_params=pltpu.CompilerParams(
            dimension_semantics=("parallel",),
            vmem_limit_bytes=_vmem_limit_bytes(),
        ),
    )(pooled_pad, params["w_base"], params["b_base"],
      params["w_bott"], params["b_bott"],
      params["w_cls"], params["b_cls"])


# ----------------------------------------------------------------------------
# JAN_Net wrapper
# ----------------------------------------------------------------------------
def jan_net_forward(x, params):
    class_num = params["class_num"]
    bottleneck_dim = params["bottleneck_dim"]
    B, Cin = x.shape[0], x.shape[1]
    cin_pad = params["w_base"].shape[0]

    # stand-in base_network: global average pool; the linear projection is
    # fused into the Pallas kernel (no (B, F) HBM round trip).
    pooled = jnp.mean(x, axis=(2, 3)).astype(jnp.bfloat16)       # (B, Cin)

    b_pad, tile_b = _pick_batch_tiling(B)
    pooled_pad = jnp.pad(pooled, ((0, b_pad - B), (0, cin_pad - Cin)))

    bott_pad, logits_pad, sm_pad = jan_head_padded(pooled_pad, params, tile_b)

    features = bott_pad[:B, :bottleneck_dim]
    outputs = logits_pad[:B, :class_num]
    softmax_outputs = sm_pad[:B, :class_num]
    return features, outputs, softmax_outputs


def init_params(key, in_channels, base_dim, bottleneck_dim, class_num):
    k0, k1, k2 = jax.random.split(key, 3)

    cin_pad = _round_up(in_channels, 128)
    f_pad = _round_up(base_dim, 128)
    db_pad = _round_up(bottleneck_dim, 128)
    c_pad = _round_up(class_num, 128)

    # stand-in backbone projection (deterministic, synthetic)
    w_base = jax.random.normal(k0, (in_channels, base_dim), jnp.float32) * 0.05
    b_base = jnp.zeros((base_dim,), jnp.float32)
    # bottleneck_layer.weight ~ N(0, 0.005), bias = 0.1
    w_bott = jax.random.normal(k1, (base_dim, bottleneck_dim), jnp.float32) * 0.005
    b_bott = jnp.full((bottleneck_dim,), 0.1, jnp.float32)
    # classifier_layer.weight ~ N(0, 0.01), bias = 0.0
    w_cls = jax.random.normal(k2, (bottleneck_dim, class_num), jnp.float32) * 0.01
    b_cls = jnp.zeros((class_num,), jnp.float32)

    def pad_w(w, rows, cols):
        # zero-padding keeps the math exact: padded lanes contribute nothing
        out = jnp.zeros((rows, cols), jnp.bfloat16)
        return out.at[:w.shape[0], :w.shape[1]].set(w.astype(jnp.bfloat16))

    def pad_b(b, cols, pad_value=0.0):
        out = jnp.full((1, cols), pad_value, jnp.float32)
        return out.at[0, :b.shape[0]].set(b)

    return dict(
        w_base=pad_w(w_base, cin_pad, f_pad),
        b_base=pad_b(b_base, f_pad),
        w_bott=pad_w(w_bott, f_pad, db_pad),
        b_bott=pad_b(b_bott, db_pad),
        w_cls=pad_w(w_cls, db_pad, c_pad),
        # padded class lanes get -1e30 so softmax gives them exactly 0 mass
        b_cls=pad_b(b_cls, c_pad, pad_value=_NEG_BIG),
        class_num=class_num,
        bottleneck_dim=bottleneck_dim,
    )


if __name__ == "__main__":
    # small shapes: batch=2, channels=4, spatial=16x16,
    # base feature dim=64 (stand-in for ResNet50's 2048),
    # bottleneck_dim=32 (stand-in for 256), class_num=31 (JAN default)
    B, Cin, H, W = 2, 4, 16, 16
    BASE_DIM, BOTTLENECK_DIM, CLASS_NUM = 64, 32, 31

    key = jax.random.PRNGKey(0)
    kx, kp = jax.random.split(key)
    x = jax.random.normal(kx, (B, Cin, H, W), jnp.float32)
    params = init_params(kp, Cin, BASE_DIM, BOTTLENECK_DIM, CLASS_NUM)

    features, outputs, softmax_outputs = jan_net_forward(x, params)
    jax.block_until_ready((features, outputs, softmax_outputs))

    # sanity: shapes, softmax normalization, softmax consistent with logits
    assert features.shape == (B, BOTTLENECK_DIM)
    assert outputs.shape == (B, CLASS_NUM)
    assert softmax_outputs.shape == (B, CLASS_NUM)
    assert jnp.allclose(jnp.sum(softmax_outputs, axis=-1), 1.0, atol=1e-5)
    assert jnp.allclose(softmax_outputs, jax.nn.softmax(outputs, axis=-1), atol=1e-4)

    print("KERNEL_OK")
</pallas_src>

<mosaic_0001>
module attributes {stable_mosaic.version = 11 : i64} {
  func.func @jan_fused_kernel(%arg0: i32, %arg1: memref<16x128xbf16, #tpu.memory_space<vmem>>, %arg2: memref<128x128xbf16, #tpu.memory_space<vmem>>, %arg3: memref<1x128xf32, #tpu.memory_space<vmem>>, %arg4: memref<128x128xbf16, #tpu.memory_space<vmem>>, %arg5: memref<1x128xf32, #tpu.memory_space<vmem>>, %arg6: memref<128x128xbf16, #tpu.memory_space<vmem>>, %arg7: memref<1x128xf32, #tpu.memory_space<vmem>>, %arg8: memref<16x128xf32, #tpu.memory_space<vmem>>, %arg9: memref<16x128xf32, #tpu.memory_space<vmem>>, %arg10: memref<16x128xf32, #tpu.memory_space<vmem>>) attributes {dimension_semantics = [#tpu.dimension_semantics<parallel>], iteration_bounds = array<i64: 1>, scalar_prefetch = 0 : i64, scratch_operands = 0 : i64, tpu.core_type = #tpu.core_type<tc>, window_params = [{transform_indices = @transform_0, window_bounds = array<i64: 16, 128>}, {pipeline_mode = #tpu.pipeline_mode<synchronous>, transform_indices = @transform_1, window_bounds = array<i64: 128, 128>}, {pipeline_mode = #tpu.pipeline_mode<synchronous>, transform_indices = @transform_2, window_bounds = array<i64: 1, 128>}, {pipeline_mode = #tpu.pipeline_mode<synchronous>, transform_indices = @transform_3, window_bounds = array<i64: 128, 128>}, {pipeline_mode = #tpu.pipeline_mode<synchronous>, transform_indices = @transform_4, window_bounds = array<i64: 1, 128>}, {pipeline_mode = #tpu.pipeline_mode<synchronous>, transform_indices = @transform_5, window_bounds = array<i64: 128, 128>}, {pipeline_mode = #tpu.pipeline_mode<synchronous>, transform_indices = @transform_6, window_bounds = array<i64: 1, 128>}, {transform_indices = @transform_7, window_bounds = array<i64: 16, 128>}, {transform_indices = @transform_8, window_bounds = array<i64: 16, 128>}, {transform_indices = @transform_9, window_bounds = array<i64: 16, 128>}]} {
    %c0 = arith.constant 0 : index
    %c0_0 = arith.constant 0 : index
    %0 = vector.load %arg1[%c0, %c0_0] : memref<16x128xbf16, #tpu.memory_space<vmem>>, vector<16x128xbf16>
    %c0_1 = arith.constant 0 : index
    %c0_2 = arith.constant 0 : index
    %1 = vector.load %arg2[%c0_1, %c0_2] : memref<128x128xbf16, #tpu.memory_space<vmem>>, vector<128x128xbf16>
    %cst = arith.constant dense<0.000000e+00> : vector<16x128xf32>
    %2 = tpu.matmul %0, %1, %cst {dimension_numbers = #tpu.dot_dimension_numbers<[1], [0], [0], [1], [0, 0, 1, 1], [], []>} : vector<16x128xbf16>, vector<128x128xbf16>, vector<16x128xf32> -> vector<16x128xf32>
    %c0_3 = arith.constant 0 : index
    %c0_4 = arith.constant 0 : index
    %3 = vector.load %arg3[%c0_3, %c0_4] : memref<1x128xf32, #tpu.memory_space<vmem>>, vector<1x128xf32>
    %4 = vector.broadcast %3 : vector<1x128xf32> to vector<16x128xf32>
    %5 = arith.addf %2, %4 : vector<16x128xf32>
    %6 = arith.truncf %5 : vector<16x128xf32> to vector<16x128xbf16>
    %c0_5 = arith.constant 0 : index
    %c0_6 = arith.constant 0 : index
    %7 = vector.load %arg4[%c0_5, %c0_6] : memref<128x128xbf16, #tpu.memory_space<vmem>>, vector<128x128xbf16>
    %cst_7 = arith.constant dense<0.000000e+00> : vector<16x128xf32>
    %8 = tpu.matmul %6, %7, %cst_7 {dimension_numbers = #tpu.dot_dimension_numbers<[1], [0], [0], [1], [0, 0, 1, 1], [], []>} : vector<16x128xbf16>, vector<128x128xbf16>, vector<16x128xf32> -> vector<16x128xf32>
    %c0_8 = arith.constant 0 : index
    %c0_9 = arith.constant 0 : index
    %9 = vector.load %arg5[%c0_8, %c0_9] : memref<1x128xf32, #tpu.memory_space<vmem>>, vector<1x128xf32>
    %10 = vector.broadcast %9 : vector<1x128xf32> to vector<16x128xf32>
    %11 = arith.addf %8, %10 : vector<16x128xf32>
    %c0_10 = arith.constant 0 : index
    %c0_11 = arith.constant 0 : index
    %12 = vector.load %arg8[%c0_10, %c0_11] : memref<16x128xf32, #tpu.memory_space<vmem>>, vector<16x128xf32>
    tpu.vector_store %arg8[%c0_10, %c0_11], %11 {strides = array<i32>} : memref<16x128xf32, #tpu.memory_space<vmem>>, vector<16x128xf32>,
    %13 = arith.truncf %11 : vector<16x128xf32> to vector<16x128xbf16>
    %c0_12 = arith.constant 0 : index
    %c0_13 = arith.constant 0 : index
    %14 = vector.load %arg6[%c0_12, %c0_13] : memref<128x128xbf16, #tpu.memory_space<vmem>>, vector<128x128xbf16>
    %cst_14 = arith.constant dense<0.000000e+00> : vector<16x128xf32>
    %15 = tpu.matmul %13, %14, %cst_14 {dimension_numbers = #tpu.dot_dimension_numbers<[1], [0], [0], [1], [0, 0, 1, 1], [], []>} : vector<16x128xbf16>, vector<128x128xbf16>, vector<16x128xf32> -> vector<16x128xf32>
    %c0_15 = arith.constant 0 : index
    %c0_16 = arith.constant 0 : index
    %16 = vector.load %arg7[%c0_15, %c0_16] : memref<1x128xf32, #tpu.memory_space<vmem>>, vector<1x128xf32>
    %17 = vector.broadcast %16 : vector<1x128xf32> to vector<16x128xf32>
    %18 = arith.addf %15, %17 : vector<16x128xf32>
    %c0_17 = arith.constant 0 : index
    %c0_18 = arith.constant 0 : index
    %19 = vector.load %arg9[%c0_17, %c0_18] : memref<16x128xf32, #tpu.memory_space<vmem>>, vector<16x128xf32>
    tpu.vector_store %arg9[%c0_17, %c0_18], %18 {strides = array<i32>} : memref<16x128xf32, #tpu.memory_space<vmem>>, vector<16x128xf32>,
    %cst_19 = arith.constant dense<0xFF800000> : vector<16xf32>
    %20 = vector.multi_reduction <maximumf>, %18, %cst_19 [1] : vector<16x128xf32> to vector<16xf32>
    %21 = vector.shape_cast %20 : vector<16xf32> to vector<16x1xf32>
    %22 = vector.broadcast %21 : vector<16x1xf32> to vector<16x128xf32>
    %23 = arith.subf %18, %22 : vector<16x128xf32>
    %24 = math.exp %23 : vector<16x128xf32>
    %cst_20 = arith.constant dense<0.000000e+00> : vector<16xf32>
    %25 = vector.multi_reduction <add>, %24, %cst_20 [1] : vector<16x128xf32> to vector<16xf32>
    %26 = vector.shape_cast %25 : vector<16xf32> to vector<16x1xf32>
    %27 = vector.broadcast %26 : vector<16x1xf32> to vector<16x128xf32>
    %28 = arith.divf %24, %27 : vector<16x128xf32>
    %c0_21 = arith.constant 0 : index
    %c0_22 = arith.constant 0 : index
    %29 = vector.load %arg10[%c0_21, %c0_22] : memref<16x128xf32, #tpu.memory_space<vmem>>, vector<16x128xf32>
    tpu.vector_store %arg10[%c0_21, %c0_22], %28 {strides = array<i32>} : memref<16x128xf32, #tpu.memory_space<vmem>>, vector<16x128xf32>,
    return
  }
  func.func @transform_0(%arg0: i32) -> (i32, i32) {
    %c0_i32 = arith.constant 0 : i32
    %c0_i32_0 = arith.constant 0 : i32
    return %arg0, %c0_i32 : i32, i32
  }
  func.func @transform_1(%arg0: i32) -> (i32, i32) {
    %c0_i32 = arith.constant 0 : i32
    %c0_i32_0 = arith.constant 0 : i32
    %c0_i32_1 = arith.constant 0 : i32
    return %c0_i32, %c0_i32_0 : i32, i32
  }
  func.func @transform_2(%arg0: i32) -> (i32, i32) {
    %c0_i32 = arith.constant 0 : i32
    %c0_i32_0 = arith.constant 0 : i32
    %c0_i32_1 = arith.constant 0 : i32
    return %c0_i32, %c0_i32_0 : i32, i32
  }
  func.func @transform_3(%arg0: i32) -> (i32, i32) {
    %c0_i32 = arith.constant 0 : i32
    %c0_i32_0 = arith.constant 0 : i32
    %c0_i32_1 = arith.constant 0 : i32
    return %c0_i32, %c0_i32_0 : i32, i32
  }
  func.func @transform_4(%arg0: i32) -> (i32, i32) {
    %c0_i32 = arith.constant 0 : i32
    %c0_i32_0 = arith.constant 0 : i32
    %c0_i32_1 = arith.constant 0 : i32
    return %c0_i32, %c0_i32_0 : i32, i32
  }
  func.func @transform_5(%arg0: i32) -> (i32, i32) {
    %c0_i32 = arith.constant 0 : i32
    %c0_i32_0 = arith.constant 0 : i32
    %c0_i32_1 = arith.constant 0 : i32
    return %c0_i32, %c0_i32_0 : i32, i32
  }
  func.func @transform_6(%arg0: i32) -> (i32, i32) {
    %c0_i32 = arith.constant 0 : i32
    %c0_i32_0 = arith.constant 0 : i32
    %c0_i32_1 = arith.constant 0 : i32
    return %c0_i32, %c0_i32_0 : i32, i32
  }
  func.func @transform_7(%arg0: i32) -> (i32, i32) {
    %c0_i32 = arith.constant 0 : i32
    %c0_i32_0 = arith.constant 0 : i32
    return %arg0, %c0_i32 : i32, i32
  }
  func.func @transform_8(%arg0: i32) -> (i32, i32) {
    %c0_i32 = arith.constant 0 : i32
    %c0_i32_0 = arith.constant 0 : i32
    return %arg0, %c0_i32 : i32, i32
  }
  func.func @transform_9(%arg0: i32) -> (i32, i32) {
    %c0_i32 = arith.constant 0 : i32
    %c0_i32_0 = arith.constant 0 : i32
    return %arg0, %c0_i32 : i32, i32
  }
}

</mosaic_0001>

<llo_original>
// kernel: tpu_custom_call.1
$region0: #{tpu_custom_call.1}
  #allocation0 [shape = 'u32[]', space=smem, size = 0x4, offset = 0x4, fixed_abs, tag = 'smem constant byte address 0x4 - core index']
  #allocation1 [shape = 'u32[144,128]{1,0:T(1,128)}', space=vmem, size = 0x12000, scoped, tag = 'internal scratch']
  %s0 = inlined_call_operand.hbm [shape: bf16[16,128], index: 0, kind: input, shape index: {}]
  %s1 = inlined_call_operand.hbm [shape: bf16[128,128], index: 1, kind: input, shape index: {}]
  %s2 = inlined_call_operand.vmem [shape: f32[1,128], index: 2, kind: input, shape index: {}]
  %s3 = inlined_call_operand.hbm [shape: bf16[128,128], index: 3, kind: input, shape index: {}]
  %s4 = inlined_call_operand.vmem [shape: f32[1,128], index: 4, kind: input, shape index: {}]
  %s5 = inlined_call_operand.hbm [shape: bf16[128,128], index: 5, kind: input, shape index: {}]
  %s6 = inlined_call_operand.vmem [shape: f32[1,128], index: 6, kind: input, shape index: {}]
  %s7 = inlined_call_operand.hbm [shape: f32[16,128], index: 7, kind: output, shape index: {0}]
  %s8 = inlined_call_operand.hbm [shape: f32[16,128], index: 8, kind: output, shape index: {1}]
  %s9 = inlined_call_operand.hbm [shape: f32[16,128], index: 9, kind: output, shape index: {2}]
  %10 = xla_tuple %s7, %s8, %s9
  %s11 = sld [smem:[#allocation0]]
  $region70: #{tpu_custom_call.1} parent=0
    _
  %s13 = ssub.s32 1, %s11
  %s14 = scalar_select 0, %s13, %s11
  $region1: #{tpu_custom_call.1} parent=0
    #allocation2 [shape = 'u8[4096]{0}', space=vmem, size = 0x1000, scoped, tag = 'input window, operand 0, single buffered']
    #allocation3 [shape = 's32[1]{0}', space=sflag, size = 0x4, scoped, tag = 'scoped memory for tpu_custom_call.1']
    #allocation4 [shape = 's32[1]{0}', space=sflag, size = 0x4, scoped, tag = 'scoped memory for tpu_custom_call.1']
    #allocation5 [shape = 'u8[32768]{0}', space=vmem, size = 0x8000, scoped, tag = 'input window, operand 1, single buffered']
    #allocation6 [shape = 's32[1]{0}', space=sflag, size = 0x4, scoped, tag = 'scoped memory for tpu_custom_call.1']
    #allocation7 [shape = 'u8[32768]{0}', space=vmem, size = 0x8000, scoped, tag = 'input window, operand 3, single buffered']
    #allocation8 [shape = 'u8[32768]{0}', space=vmem, size = 0x8000, scoped, tag = 'input window, operand 5, single buffered']
    #allocation9 [shape = 's32[1]{0}', space=sflag, size = 0x4, scoped, tag = 'scoped memory for tpu_custom_call.1']
    #allocation10 [shape = 'u8[8192]{0}', space=vmem, size = 0x2000, scoped, tag = 'output window, operand 0, single buffered']
    #allocation11 [shape = 'u8[8192]{0}', space=vmem, size = 0x2000, scoped, tag = 'output window, operand 1, single buffered']
    #allocation12 [shape = 's32[1]{0}', space=sflag, size = 0x4, scoped, tag = 'scoped memory for tpu_custom_call.1']
    #allocation13 [shape = 'u8[8192]{0}', space=vmem, size = 0x2000, scoped, tag = 'output window, operand 2, single buffered']
    %15 = vsyncpa [#allocation3], 0
    %16 = vsyncpa [#allocation6], 0
    %17 = vsyncpa [#allocation9], 0
    %18 = vsyncpa [#allocation4], 0
    %19 = vsyncpa [#allocation12], 0
    // Predicated region
    $region2: #{tpu_custom_call.1} parent=1 // pred_check
      _
    $region3: #{tpu_custom_call.1} parent=1 // pred_check_branch
      %21 = sbr.rel (0) target = $region5
    $region4: #{tpu_custom_call.1} parent=1 // pred_region
      %s23 = ssub.s32 128, 128
      %24 = vsyncadd [#allocation3], %s23
      %s25 = sshll.u32 [#allocation2], 4
      %s26 = int_to_ptr.vmem [resolvable:$true] %s25
      %31 = dma.hbm_to_vmem [thread:$0]  %s0, 128, %s26, [#allocation3], 64, 64, 4
    $region5: #{tpu_custom_call.1} parent=1 // pred_fallthru
      _
    // Predicated region
    $region6: #{tpu_custom_call.1} parent=1 // pred_check
      _
    $region7: #{tpu_custom_call.1} parent=1 // pred_check_branch
      %33 = sbr.rel (0) target = $region9
    $region8: #{tpu_custom_call.1} parent=1 // pred_region
      %s35 = ssub.s32 1024, 1024
      %36 = vsyncadd [#allocation6], %s35
      %s37 = sshll.u32 [#allocation5], 4
      %s38 = int_to_ptr.vmem [resolvable:$true] %s37
      %43 = dma.hbm_to_vmem [thread:$0]  %s1, 1024, %s38, [#allocation6], 64, 64, 4
    $region9: #{tpu_custom_call.1} parent=1 // pred_fallthru
      _
    // Predicated region
    $region10: #{tpu_custom_call.1} parent=1 // pred_check
      _
    $region11: #{tpu_custom_call.1} parent=1 // pred_check_branch
      %45 = sbr.rel (0) target = $region13
    $region12: #{tpu_custom_call.1} parent=1 // pred_region
      _
    $region13: #{tpu_custom_call.1} parent=1 // pred_fallthru
      _
    // Predicated region
    $region14: #{tpu_custom_call.1} parent=1 // pred_check
      _
    $region15: #{tpu_custom_call.1} parent=1 // pred_check_branch
      %47 = sbr.rel (0) target = $region17
    $region16: #{tpu_custom_call.1} parent=1 // pred_region
      %s49 = ssub.s32 1024, 1024
      %50 = vsyncadd [#allocation6], %s49
      %s51 = sshll.u32 [#allocation7], 4
      %s52 = int_to_ptr.vmem [resolvable:$true] %s51
      %57 = dma.hbm_to_vmem [thread:$0]  %s3, 1024, %s52, [#allocation6], 64, 64, 4
    $region17: #{tpu_custom_call.1} parent=1 // pred_fallthru
      _
    // Predicated region
    $region18: #{tpu_custom_call.1} parent=1 // pred_check
      _
    $region19: #{tpu_custom_call.1} parent=1 // pred_check_branch
      %59 = sbr.rel (0) target = $region21
    $region20: #{tpu_custom_call.1} parent=1 // pred_region
      _
    $region21: #{tpu_custom_call.1} parent=1 // pred_fallthru
      _
    // Predicated region
    $region22: #{tpu_custom_call.1} parent=1 // pred_check
      _
    $region23: #{tpu_custom_call.1} parent=1 // pred_check_branch
      %61 = sbr.rel (0) target = $region25
    $region24: #{tpu_custom_call.1} parent=1 // pred_region
      %s63 = ssub.s32 1024, 1024
      %64 = vsyncadd [#allocation9], %s63
      %s65 = sshll.u32 [#allocation8], 4
      %s66 = int_to_ptr.vmem [resolvable:$true] %s65
      %71 = dma.hbm_to_vmem [thread:$0]  %s5, 1024, %s66, [#allocation9], 64, 64, 4
    $region25: #{tpu_custom_call.1} parent=1 // pred_fallthru
      _
    // Predicated region
    $region26: #{tpu_custom_call.1} parent=1 // pred_check
      _
    $region27: #{tpu_custom_call.1} parent=1 // pred_check_branch
      %73 = sbr.rel (0) target = $region29
    $region28: #{tpu_custom_call.1} parent=1 // pred_region
      _
    $region29: #{tpu_custom_call.1} parent=1 // pred_fallthru
      _
    // Predicated region
    $region30: #{tpu_custom_call.1} parent=1 // pred_check
      _
    $region31: #{tpu_custom_call.1} parent=1 // pred_check_branch
      %75 = sbr.rel (0) target = $region33
    $region32: #{tpu_custom_call.1} parent=1 // pred_region
      %76 = dma.done [#allocation3], 128
    $region33: #{tpu_custom_call.1} parent=1 // pred_fallthru
      _
    // Predicated region
    $region34: #{tpu_custom_call.1} parent=1 // pred_check
      _
    $region35: #{tpu_custom_call.1} parent=1 // pred_check_branch
      %78 = sbr.rel (0) target = $region37
    $region36: #{tpu_custom_call.1} parent=1 // pred_region
      %79 = dma.done [#allocation6], 1024
    $region37: #{tpu_custom_call.1} parent=1 // pred_fallthru
      _
    // Predicated region
    $region38: #{tpu_custom_call.1} parent=1 // pred_check
      _
    $region39: #{tpu_custom_call.1} parent=1 // pred_check_branch
      %81 = sbr.rel (0) target = $region41
    $region40: #{tpu_custom_call.1} parent=1 // pred_region
      %82 = dma.done [#allocation6], 1024
    $region41: #{tpu_custom_call.1} parent=1 // pred_fallthru
      _
    // Predicated region
    $region42: #{tpu_custom_call.1} parent=1 // pred_check
      _
    $region43: #{tpu_custom_call.1} parent=1 // pred_check_branch
      %84 = sbr.rel (0) target = $region45
    $region44: #{tpu_custom_call.1} parent=1 // pred_region
      %85 = dma.done [#allocation9], 1024
    $region45: #{tpu_custom_call.1} parent=1 // pred_fallthru
      _
    %v87 = vld [vmem:[#allocation2] sm:$0xf]
    %v88 = vld [vmem:[#allocation2 + $0x4] sm:$0xf]
    %v89 = vld [vmem:[#allocation5] sm:$0xf]
    %v90 = vld [vmem:[#allocation5 + $0x4] sm:$0xf]
    %v91 = vld [vmem:[#allocation5 + $0x8] sm:$0xf]
    %v92 = vld [vmem:[#allocation5 + $0xc] sm:$0xf]
    %v93 = vld [vmem:[#allocation5 + $0x10] sm:$0xf]
    %v94 = vld [vmem:[#allocation5 + $0x14] sm:$0xf]
    %v95 = vld [vmem:[#allocation5 + $0x18] sm:$0xf]
    %v96 = vld [vmem:[#allocation5 + $0x1c] sm:$0xf]
    %v97 = vld [vmem:[#allocation5 + $0x20] sm:$0xf]
    %v98 = vld [vmem:[#allocation5 + $0x24] sm:$0xf]
    %v99 = vld [vmem:[#allocation5 + $0x28] sm:$0xf]
    %v100 = vld [vmem:[#allocation5 + $0x2c] sm:$0xf]
    %v101 = vld [vmem:[#allocation5 + $0x30] sm:$0xf]
    %v102 = vld [vmem:[#allocation5 + $0x34] sm:$0xf]
    %v103 = vld [vmem:[#allocation5 + $0x38] sm:$0xf]
    %v104 = vld [vmem:[#allocation5 + $0x3c] sm:$0xf]
    %v105 = vld [vmem:[%s2] sm:$0x1]
    %v107 = vlaneseq
    %v108 = vshrl.u32 %v107, 7
    %v109 = vsub.s32 0, %v108
    %v110 = vrot.slane %v105, %v109
    %v114 = vunpack.c.l.b16 %v87
    %v115 = vunpack.c.l.b16 %v88
    %v116 = vpack.c.b16 %v115, %v114
    %v134 = vunpack.c.l.b16 %v89
    %v135 = vunpack.c.l.b16 %v90
    %v136 = vunpack.c.l.b16 %v91
    %v137 = vunpack.c.l.b16 %v92
    %v138 = vunpack.c.l.b16 %v93
    %v139 = vunpack.c.l.b16 %v94
    %v140 = vunpack.c.l.b16 %v95
    %v141 = vunpack.c.l.b16 %v96
    %v142 = vunpack.c.l.b16 %v97
    %v143 = vunpack.c.l.b16 %v98
    %v144 = vunpack.c.l.b16 %v99
    %v145 = vunpack.c.l.b16 %v100
    %v146 = vunpack.c.l.b16 %v101
    %v147 = vunpack.c.l.b16 %v102
    %v148 = vunpack.c.l.b16 %v103
    %v149 = vunpack.c.l.b16 %v104
    %v150 = vpack.c.b16 %v135, %v134
    %v151 = vpack.c.b16 %v137, %v136
    %v152 = vpack.c.b16 %v139, %v138
    %v153 = vpack.c.b16 %v141, %v140
    %v154 = vpack.c.b16 %v143, %v142
    %v155 = vpack.c.b16 %v145, %v144
    %v156 = vpack.c.b16 %v147, %v146
    %v157 = vpack.c.b16 %v149, %v148
    %166 = vmatprep.subr.bf16.mxu0 0
    %167 = vmatpush1.bf16.msra.mxu0 %v150
    %168 = vmatprep.subr.bf16.mxu0 0
    %169 = vmatpush1.bf16.msra.mxu0 %v151
    %170 = vmatprep.subr.bf16.mxu0 0
    %171 = vmatpush1.bf16.msra.mxu0 %v152
    %172 = vmatprep.subr.bf16.mxu0 0
    %173 = vmatpush1.bf16.msra.mxu0 %v153
    %174 = vmatprep.subr.bf16.mxu0 0
    %175 = vmatpush1.bf16.msra.mxu0 %v154
    %176 = vmatprep.subr.bf16.mxu0 0
    %177 = vmatpush1.bf16.msra.mxu0 %v155
    %178 = vmatprep.subr.bf16.mxu0 0
    %179 = vmatpush1.bf16.msra.mxu0 %v156
    %180 = vmatprep.subr.bf16.mxu0 0
    %181 = vmatpush1.bf16.msra.mxu0 %v157
    %182 = vmatprep.subr.bf16.mxu0 0
    %183 = vmatpush1.bf16.msra.mxu0 0
    %184 = vmatprep.subr.bf16.mxu0 0
    %185 = vmatpush1.bf16.msra.mxu0 0
    %186 = vmatprep.subr.bf16.mxu0 0
    %187 = vmatpush1.bf16.msra.mxu0 0
    %188 = vmatprep.subr.bf16.mxu0 0
    %189 = vmatpush1.bf16.msra.mxu0 0
    %190 = vmatprep.subr.bf16.mxu0 0
    %191 = vmatpush1.bf16.msra.mxu0 0
    %192 = vmatprep.subr.bf16.mxu0 0
    %193 = vmatpush1.bf16.msra.mxu0 0
    %194 = vmatprep.subr.bf16.mxu0 0
    %195 = vmatpush1.bf16.msra.mxu0 0
    %196 = vmatprep.subr.bf16.mxu0 0
    %197 = vmatpush1.bf16.msra.mxu0 0
    %198 = vmatprep.mubr.bf16.mxu0 0
    %199 = vmatmul.mubr.bf16.gmra.mrb[0].mxu0 %v116
    %v200 = vpop.f32.mrb[0].mxu0
    %v201 = vadd.f32 %v110, %v200
    %v202 = vpop.f32.mrb[0].mxu0
    %v203 = vpop.f32.mrb[0].mxu0
    %v204 = vadd.f32 %v110, %v203
    %v205 = vpop.f32.mrb[0].mxu0
    %206 = vdwg.mxu0
    %v207 = vpack.c.bf16 %v204, %v201
    %v208 = vld [vmem:[#allocation7] sm:$0xf]
    %v209 = vld [vmem:[#allocation7 + $0x4] sm:$0xf]
    %v210 = vld [vmem:[#allocation7 + $0x8] sm:$0xf]
    %v211 = vld [vmem:[#allocation7 + $0xc] sm:$0xf]
    %v212 = vld [vmem:[#allocation7 + $0x10] sm:$0xf]
    %v213 = vld [vmem:[#allocation7 + $0x14] sm:$0xf]
    %v214 = vld [vmem:[#allocation7 + $0x18] sm:$0xf]
    %v215 = vld [vmem:[#allocation7 + $0x1c] sm:$0xf]
    %v216 = vld [vmem:[#allocation7 + $0x20] sm:$0xf]
    %v217 = vld [vmem:[#allocation7 + $0x24] sm:$0xf]
    %v218 = vld [vmem:[#allocation7 + $0x28] sm:$0xf]
    %v219 = vld [vmem:[#allocation7 + $0x2c] sm:$0xf]
    %v220 = vld [vmem:[#allocation7 + $0x30] sm:$0xf]
    %v221 = vld [vmem:[#allocation7 + $0x34] sm:$0xf]
    %v222 = vld [vmem:[#allocation7 + $0x38] sm:$0xf]
    %v223 = vld [vmem:[#allocation7 + $0x3c] sm:$0xf]
    %v224 = vld [vmem:[%s4] sm:$0x1]
    %v226 = vlaneseq
    %v227 = vshrl.u32 %v226, 7
    %v228 = vsub.s32 0, %v227
    %v229 = vrot.slane %v224, %v228
    %v247 = vunpack.c.l.b16 %v208
    %v248 = vunpack.c.l.b16 %v209
    %v249 = vunpack.c.l.b16 %v210
    %v250 = vunpack.c.l.b16 %v211
    %v251 = vunpack.c.l.b16 %v212
    %v252 = vunpack.c.l.b16 %v213
    %v253 = vunpack.c.l.b16 %v214
    %v254 = vunpack.c.l.b16 %v215
    %v255 = vunpack.c.l.b16 %v216
    %v256 = vunpack.c.l.b16 %v217
    %v257 = vunpack.c.l.b16 %v218
    %v258 = vunpack.c.l.b16 %v219
    %v259 = vunpack.c.l.b16 %v220
    %v260 = vunpack.c.l.b16 %v221
    %v261 = vunpack.c.l.b16 %v222
    %v262 = vunpack.c.l.b16 %v223
    %v263 = vpack.c.b16 %v248, %v247
    %v264 = vpack.c.b16 %v250, %v249
    %v265 = vpack.c.b16 %v252, %v251
    %v266 = vpack.c.b16 %v254, %v253
    %v267 = vpack.c.b16 %v256, %v255
    %v268 = vpack.c.b16 %v258, %v257
    %v269 = vpack.c.b16 %v260, %v259
    %v270 = vpack.c.b16 %v262, %v261
    %279 = vmatprep.subr.bf16.mxu0 0
    %280 = vmatpush1.bf16.msra.mxu0 %v263
    %281 = vmatprep.subr.bf16.mxu0 0
    %282 = vmatpush1.bf16.msra.mxu0 %v264
    %283 = vmatprep.subr.bf16.mxu0 0
    %284 = vmatpush1.bf16.msra.mxu0 %v265
    %285 = vmatprep.subr.bf16.mxu0 0
    %286 = vmatpush1.bf16.msra.mxu0 %v266
    %287 = vmatprep.subr.bf16.mxu0 0
    %288 = vmatpush1.bf16.msra.mxu0 %v267
    %289 = vmatprep.subr.bf16.mxu0 0
    %290 = vmatpush1.bf16.msra.mxu0 %v268
    %291 = vmatprep.subr.bf16.mxu0 0
    %292 = vmatpush1.bf16.msra.mxu0 %v269
    %293 = vmatprep.subr.bf16.mxu0 0
    %294 = vmatpush1.bf16.msra.mxu0 %v270
    %295 = vmatprep.subr.bf16.mxu0 0
    %296 = vmatpush1.bf16.msra.mxu0 0
    %297 = vmatprep.subr.bf16.mxu0 0
    %298 = vmatpush1.bf16.msra.mxu0 0
    %299 = vmatprep.subr.bf16.mxu0 0
    %300 = vmatpush1.bf16.msra.mxu0 0
    %301 = vmatprep.subr.bf16.mxu0 0
    %302 = vmatpush1.bf16.msra.mxu0 0
    %303 = vmatprep.subr.bf16.mxu0 0
    %304 = vmatpush1.bf16.msra.mxu0 0
    %305 = vmatprep.subr.bf16.mxu0 0
    %306 = vmatpush1.bf16.msra.mxu0 0
    %307 = vmatprep.subr.bf16.mxu0 0
    %308 = vmatpush1.bf16.msra.mxu0 0
    %309 = vmatprep.subr.bf16.mxu0 0
    %310 = vmatpush1.bf16.msra.mxu0 0
    %311 = vmatprep.mubr.bf16.mxu0 0
    %312 = vmatmul.mubr.bf16.gmra.mrb[0].mxu0 %v207
    %v313 = vpop.f32.mrb[0].mxu0
    %v314 = vadd.f32 %v229, %v313
    %v315 = vpop.f32.mrb[0].mxu0
    %v316 = vpop.f32.mrb[0].mxu0
    %v317 = vadd.f32 %v229, %v316
    %v318 = vpop.f32.mrb[0].mxu0
    %319 = vdwg.mxu0
    %320 = vst [vmem:[#allocation10] sm:$0xff] %v314
    %321 = vst [vmem:[#allocation10 + $0x8] sm:$0xff] %v317
    %v322 = vpack.c.bf16 %v317, %v314
    %v323 = vld [vmem:[#allocation8] sm:$0xf]
    %v324 = vld [vmem:[#allocation8 + $0x4] sm:$0xf]
    %v325 = vld [vmem:[#allocation8 + $0x8] sm:$0xf]
    %v326 = vld [vmem:[#allocation8 + $0xc] sm:$0xf]
    %v327 = vld [vmem:[#allocation8 + $0x10] sm:$0xf]
    %v328 = vld [vmem:[#allocation8 + $0x14] sm:$0xf]
    %v329 = vld [vmem:[#allocation8 + $0x18] sm:$0xf]
    %v330 = vld [vmem:[#allocation8 + $0x1c] sm:$0xf]
    %v331 = vld [vmem:[#allocation8 + $0x20] sm:$0xf]
    %v332 = vld [vmem:[#allocation8 + $0x24] sm:$0xf]
    %v333 = vld [vmem:[#allocation8 + $0x28] sm:$0xf]
    %v334 = vld [vmem:[#allocation8 + $0x2c] sm:$0xf]
    %v335 = vld [vmem:[#allocation8 + $0x30] sm:$0xf]
    %v336 = vld [vmem:[#allocation8 + $0x34] sm:$0xf]
    %v337 = vld [vmem:[#allocation8 + $0x38] sm:$0xf]
    %v338 = vld [vmem:[#allocation8 + $0x3c] sm:$0xf]
    %v339 = vld [vmem:[%s6] sm:$0x1]
    %v341 = vlaneseq
    %v342 = vshrl.u32 %v341, 7
    %v343 = vsub.s32 0, %v342
    %v344 = vrot.slane %v339, %v343
    %v362 = vunpack.c.l.b16 %v323
    %v363 = vunpack.c.l.b16 %v324
    %v364 = vunpack.c.l.b16 %v325
    %v365 = vunpack.c.l.b16 %v326
    %v366 = vunpack.c.l.b16 %v327
    %v367 = vunpack.c.l.b16 %v328
    %v368 = vunpack.c.l.b16 %v329
    %v369 = vunpack.c.l.b16 %v330
    %v370 = vunpack.c.l.b16 %v331
    %v371 = vunpack.c.l.b16 %v332
    %v372 = vunpack.c.l.b16 %v333
    %v373 = vunpack.c.l.b16 %v334
    %v374 = vunpack.c.l.b16 %v335
    %v375 = vunpack.c.l.b16 %v336
    %v376 = vunpack.c.l.b16 %v337
    %v377 = vunpack.c.l.b16 %v338
    %v378 = vpack.c.b16 %v363, %v362
    %v379 = vpack.c.b16 %v365, %v364
    %v380 = vpack.c.b16 %v367, %v366
    %v381 = vpack.c.b16 %v369, %v368
    %v382 = vpack.c.b16 %v371, %v370
    %v383 = vpack.c.b16 %v373, %v372
    %v384 = vpack.c.b16 %v375, %v374
    %v385 = vpack.c.b16 %v377, %v376
    %394 = vmatprep.subr.bf16.mxu0 0
    %395 = vmatpush1.bf16.msra.mxu0 %v378
    %396 = vmatprep.subr.bf16.mxu0 0
    %397 = vmatpush1.bf16.msra.mxu0 %v379
    %398 = vmatprep.subr.bf16.mxu0 0
    %399 = vmatpush1.bf16.msra.mxu0 %v380
    %400 = vmatprep.subr.bf16.mxu0 0
    %401 = vmatpush1.bf16.msra.mxu0 %v381
    %402 = vmatprep.subr.bf16.mxu0 0
    %403 = vmatpush1.bf16.msra.mxu0 %v382
    %404 = vmatprep.subr.bf16.mxu0 0
    %405 = vmatpush1.bf16.msra.mxu0 %v383
    %406 = vmatprep.subr.bf16.mxu0 0
    %407 = vmatpush1.bf16.msra.mxu0 %v384
    %408 = vmatprep.subr.bf16.mxu0 0
    %409 = vmatpush1.bf16.msra.mxu0 %v385
    %410 = vmatprep.subr.bf16.mxu0 0
    %411 = vmatpush1.bf16.msra.mxu0 0
    %412 = vmatprep.subr.bf16.mxu0 0
    %413 = vmatpush1.bf16.msra.mxu0 0
    %414 = vmatprep.subr.bf16.mxu0 0
    %415 = vmatpush1.bf16.msra.mxu0 0
    %416 = vmatprep.subr.bf16.mxu0 0
    %417 = vmatpush1.bf16.msra.mxu0 0
    %418 = vmatprep.subr.bf16.mxu0 0
    %419 = vmatpush1.bf16.msra.mxu0 0
    %420 = vmatprep.subr.bf16.mxu0 0
    %421 = vmatpush1.bf16.msra.mxu0 0
    %422 = vmatprep.subr.bf16.mxu0 0
    %423 = vmatpush1.bf16.msra.mxu0 0
    %424 = vmatprep.subr.bf16.mxu0 0
    %425 = vmatpush1.bf16.msra.mxu0 0
    %426 = vmatprep.mubr.bf16.mxu0 0
    %427 = vmatmul.mubr.bf16.gmra.mrb[0].mxu0 %v322
    %v428 = vpop.f32.mrb[0].mxu0
    %v429 = vadd.f32 %v344, %v428
    %v430 = vpop.f32.mrb[0].mxu0
    %v431 = vpop.f32.mrb[0].mxu0
    %v432 = vadd.f32 %v344, %v431
    %v433 = vpop.f32.mrb[0].mxu0
    %434 = vdwg.mxu0
    %435 = vst [vmem:[#allocation11] sm:$0xff] %v429
    %436 = vst [vmem:[#allocation11 + $0x8] sm:$0xff] %v432
    %437 = vmax.xlane.f32.xlu0 %v429
    %v438 = vpop.xlane.xlu0 %437
    %439 = vmax.xlane.f32.xlu0 %v432
    %v440 = vpop.xlane.xlu0 %439
    %v441 = vsub.f32 %v429, %v438
    %v442 = vsub.f32 %v432, %v440
    %v443 = vmul.f32 %v441, 1.442695
    %v444 = vpow.pop %v443
    %v445 = vmul.f32 %v442, 1.442695
    %v446 = vpow.pop %v445
    %447 = vadd.xlane.f32.xlu0 %v444
    %v448 = vpop.xlane.xlu0 %447
    %449 = vadd.xlane.f32.xlu0 %v446
    %v450 = vpop.xlane.xlu0 %449
    %v451 = vrcp.pop %v448
    %v452 = vmul.f32 %v444, %v451
    %v453 = vrcp.pop %v450
    %v454 = vmul.f32 %v446, %v453
    %455 = vst [vmem:[#allocation13] sm:$0xff] %v452
    %456 = vst [vmem:[#allocation13 + $0x8] sm:$0xff] %v454
    // Predicated region
    $region46: #{tpu_custom_call.1} parent=1 // pred_check
      _
    $region47: #{tpu_custom_call.1} parent=1 // pred_check_branch
      %458 = sbr.rel (0) target = $region49
    $region48: #{tpu_custom_call.1} parent=1 // pred_region
      %s460 = ssub.s32 256, 256
      %461 = vsyncadd [#allocation4], %s460
      %s462 = sshll.u32 [#allocation10], 4
      %s463 = int_to_ptr.vmem [resolvable:$true] %s462
      %468 = dma.vmem_to_hbm [thread:$0]  %s463, 256, %s7, [#allocation4], 128, 128, 8
    $region49: #{tpu_custom_call.1} parent=1 // pred_fallthru
      _
    // Predicated region
    $region50: #{tpu_custom_call.1} parent=1 // pred_check
      _
    $region51: #{tpu_custom_call.1} parent=1 // pred_check_branch
      %470 = sbr.rel (0) target = $region53
    $region52: #{tpu_custom_call.1} parent=1 // pred_region
      %s472 = ssub.s32 256, 256
      %473 = vsyncadd [#allocation12], %s472
      %s474 = sshll.u32 [#allocation11], 4
      %s475 = int_to_ptr.vmem [resolvable:$true] %s474
      %480 = dma.vmem_to_hbm [thread:$0]  %s475, 256, %s8, [#allocation12], 128, 128, 8
    $region53: #{tpu_custom_call.1} parent=1 // pred_fallthru
      _
    // Predicated region
    $region54: #{tpu_custom_call.1} parent=1 // pred_check
      _
    $region55: #{tpu_custom_call.1} parent=1 // pred_check_branch
      %482 = sbr.rel (0) target = $region57
    $region56: #{tpu_custom_call.1} parent=1 // pred_region
      %s484 = ssub.s32 256, 256
      %485 = vsyncadd [#allocation12], %s484
      %s486 = sshll.u32 [#allocation13], 4
      %s487 = int_to_ptr.vmem [resolvable:$true] %s486
      %492 = dma.vmem_to_hbm [thread:$0]  %s487, 256, %s9, [#allocation12], 128, 128, 8
    $region57: #{tpu_custom_call.1} parent=1 // pred_fallthru
      _
    // Predicated region
    $region58: #{tpu_custom_call.1} parent=1 // pred_check
      _
    $region59: #{tpu_custom_call.1} parent=1 // pred_check_branch
      %494 = sbr.rel (0) target = $region61
    $region60: #{tpu_custom_call.1} parent=1 // pred_region
      %495 = dma.done [#allocation4], 256
    $region61: #{tpu_custom_call.1} parent=1 // pred_fallthru
      _
    // Predicated region
    $region62: #{tpu_custom_call.1} parent=1 // pred_check
      _
    $region63: #{tpu_custom_call.1} parent=1 // pred_check_branch
      %497 = sbr.rel (0) target = $region65
    $region64: #{tpu_custom_call.1} parent=1 // pred_region
      %498 = dma.done [#allocation12], 256
    $region65: #{tpu_custom_call.1} parent=1 // pred_fallthru
      _
    // Predicated region
    $region66: #{tpu_custom_call.1} parent=1 // pred_check
      _
    $region67: #{tpu_custom_call.1} parent=1 // pred_check_branch
      %500 = sbr.rel (0) target = $region69
    $region68: #{tpu_custom_call.1} parent=1 // pred_region
      %501 = dma.done [#allocation12], 256
    $region69: #{tpu_custom_call.1} parent=1 // pred_fallthru
      _
    %502 = vsyncpa [#allocation3], 1
    %503 = vsyncpa [#allocation6], 1
    %504 = vsyncpa [#allocation9], 1
    %505 = vsyncpa [#allocation4], 1
    %506 = vsyncpa [#allocation12], 1

</llo_original>
